<compile_context>
chip_gen: v5e
topology: v5e:2x2
jax: 0.10.0
libtpu: 0.0.40
codegen_flags: <defaults>
</compile_context>

<pallas_src>
import functools

import jax
import jax.numpy as jnp
from jax.experimental import pallas as pl
from jax.experimental.pallas import tpu as pltpu

_LANES = 128
_SUBLANES = 8
_MAX_ROW_TILE = 8192                      # (8192, 128) f32 block = 4 MiB
_INPUT_VMEM_BUDGET = 24 * 1024 * 1024     # 2 inputs x 2 pipeline buffers
_CE_VMEM_BUDGET = 16 * 1024 * 1024        # logits buffers + f32 temporaries
_VMEM_LIMIT = 40 * 1024 * 1024            # < physical VMEM on v5e/v6e/v7x
_NCORES = 2                               # shard the stream on 2-TC chips; harmless on 1-TC


# --------------------------------------------------------------------------
# Cross-entropy: row-tiled reduction over N.
# --------------------------------------------------------------------------
def _ce_partial(logits, labels, n_valid, row_offset):
    """Partial sum of per-row cross entropy for one (TN, C) f32 tile -> (1, 1)."""
    tn, c = logits.shape
    row = jax.lax.broadcasted_iota(jnp.int32, (tn, 1), 0) + row_offset
    valid = row < n_valid                                                # (TN, 1)
    col = jax.lax.broadcasted_iota(jnp.int32, (tn, c), 1)
    row_max = jnp.max(logits, axis=-1, keepdims=True)                    # (TN, 1)
    lse = jnp.log(jnp.sum(jnp.exp(logits - row_max), axis=-1,
                          keepdims=True)) + row_max                      # (TN, 1)
    picked = jnp.sum(jnp.where(col == labels, logits, 0.0),
                     axis=-1, keepdims=True)                             # (TN, 1)
    per_row = jnp.where(valid, lse - picked, 0.0)                        # (TN, 1)
    return jnp.sum(per_row, axis=0, keepdims=True)                       # (1, 1)


def _ce_kernel(n_rows, logits_ref, labels_ref, out_ref, acc_ref):
    i = pl.program_id(0)
    tn = logits_ref.shape[0]

    @pl.when(i == 0)
    def _():
        acc_ref[...] = jnp.zeros_like(acc_ref)

    # Logits arrive in their native dtype; upcast on the VPU in-kernel.
    logits = logits_ref[...].astype(jnp.float32)
    acc_ref[...] += _ce_partial(logits, labels_ref[...], n_rows, i * tn)

    @pl.when(i == pl.num_programs(0) - 1)
    def _():
        out_ref[...] = acc_ref[...] * (1.0 / n_rows)


def _cross_entropy(x, y):
    """mean CrossEntropy(x, y) as a row-tiled Pallas reduction -> scalar f32."""
    n, c = x.shape
    labels = jnp.reshape(y.astype(jnp.int32), (n, 1))

    # Row tile from a VMEM byte budget: logits in 2 pipeline buffers plus ~2x
    # f32 temporaries for the softmax inside the kernel.
    # TODO(synk): for astronomically large C even 8 rows may exceed the budget;
    # that would need a second (online-LSE) tiling axis over classes.
    per_row_bytes = c * (2 * x.dtype.itemsize + 8) + 8
    tn = min(n, max(1, _CE_VMEM_BUDGET // per_row_bytes))
    if tn < n:
        tn = max(_SUBLANES, (tn // _SUBLANES) * _SUBLANES)
    grid = (pl.cdiv(n, tn),)

    cost = pl.CostEstimate(
        flops=int(5 * n * c),
        transcendentals=int(n * c),
        bytes_accessed=int(n * c * x.dtype.itemsize + n * 4 + 4),
    )
    out = pl.pallas_call(
        functools.partial(_ce_kernel, n),
        out_shape=jax.ShapeDtypeStruct((1, 1), jnp.float32),
        grid=grid,
        in_specs=[
            pl.BlockSpec((tn, c), lambda i: (i, 0)),
            pl.BlockSpec((tn, 1), lambda i: (i, 0)),
        ],
        out_specs=pl.BlockSpec((1, 1), lambda i: (0, 0)),
        scratch_shapes=[pltpu.VMEM((1, 1), jnp.float32)],
        compiler_params=pltpu.CompilerParams(
            dimension_semantics=("arbitrary",),
            vmem_limit_bytes=_VMEM_LIMIT,
        ),
        cost_estimate=cost,
    )(x, labels)
    return out[0, 0]


# --------------------------------------------------------------------------
# sum(grads * masks): HBM-streaming reduction, sharded over 2 TensorCores.
# --------------------------------------------------------------------------
def _sumprod_kernel(blocks_total, tile_extent, mask_axis, limit,
                    g_ref, m_ref, out_ref, acc_ref):
    i = pl.program_id(1)
    gi = pl.program_id(0) * pl.num_programs(1) + i      # global tile index

    @pl.when(i == 0)
    def _():
        acc_ref[...] = jnp.zeros_like(acc_ref)

    prod = g_ref[...].astype(jnp.float32) * m_ref[...].astype(jnp.float32)

    # Steady-state tiles: unmasked accumulate (mask only on the edge tile).
    @pl.when(gi < blocks_total - 1)
    def _():
        acc_ref[...] += jnp.sum(prod, keepdims=True)

    # Edge tile (and any overshoot tile of the second core): mask by LOGICAL
    # global index so padded / clamped data contributes exactly zero regardless
    # of what the runtime delivered for out-of-bounds regions.
    @pl.when(gi >= blocks_total - 1)
    def _():
        idx = jax.lax.broadcasted_iota(jnp.int32, prod.shape, mask_axis)
        idx = idx + gi * tile_extent
        acc_ref[...] += jnp.sum(jnp.where(idx < limit, prod, 0.0), keepdims=True)

    @pl.when(i == pl.num_programs(1) - 1)
    def _():
        out_ref[0] = acc_ref[...]


def _sum_prod(grads, masks):
    """sum(grads * masks) as an HBM-streaming Pallas reduction -> scalar f32."""
    g = jnp.reshape(grads, (-1,))
    m = jnp.reshape(masks, (-1,))
    total = int(g.shape[0])
    if total == 0:
        return jnp.float32(0.0)

    itemsize = g.dtype.itemsize + m.dtype.itemsize      # bytes/element, both arrays

    if total % _LANES == 0:
        # Lane+sublane dense (R, 128) view -- free reshape, zero copies.
        r = total // _LANES
        g2 = jnp.reshape(g, (r, _LANES))
        m2 = jnp.reshape(m, (r, _LANES))
        tr = min(_MAX_ROW_TILE,
                 max(1, _INPUT_VMEM_BUDGET // (_LANES * itemsize * 2)))
        if tr >= r:
            tr = r
        else:
            tr = max(_SUBLANES, (tr // _SUBLANES) * _SUBLANES)
        block = (tr, _LANES)
        blocks_total = pl.cdiv(r, tr)
        tile_extent, mask_axis, limit = tr, 0, r
        idx_of = lambda gi: (gi, 0)
    else:
        # Ragged element count: keep the arrays un-copied as a (1, total) view
        # and tile along lanes.  Single-row blocks pad to 8 sublanes in VMEM
        # (~32 B of VMEM per f32 element per buffer), so budget accordingly.
        g2 = jnp.reshape(g, (1, total))
        m2 = jnp.reshape(m, (1, total))
        be = max(_LANES, (_INPUT_VMEM_BUDGET // (32 * 4) // _LANES) * _LANES)
        be = min(be, ((total + _LANES - 1) // _LANES) * _LANES)
        block = (1, be)
        blocks_total = pl.cdiv(total, be)
        tile_extent, mask_axis, limit = be, 1, total
        idx_of = lambda gi: (0, gi)

    nc = min(_NCORES, blocks_total)
    inner = pl.cdiv(blocks_total, nc)

    def in_map(c, i):
        # Clamp so the DMA never sees an out-of-range block index; the kernel
        # masks overshoot tiles by logical index anyway.
        gi = jnp.minimum(c * inner + i, blocks_total - 1)
        return idx_of(gi)

    cost = pl.CostEstimate(
        flops=int(3 * total),
        transcendentals=0,
        bytes_accessed=int(total * itemsize + nc * 4),
    )
    partials = pl.pallas_call(
        functools.partial(_sumprod_kernel, blocks_total, tile_extent,
                          mask_axis, limit),
        out_shape=jax.ShapeDtypeStruct((nc, 1, 1), jnp.float32),
        grid=(nc, inner),
        in_specs=[
            pl.BlockSpec(block, in_map),
            pl.BlockSpec(block, in_map),
        ],
        out_specs=pl.BlockSpec((1, 1, 1), lambda c, i: (c, 0, 0)),
        scratch_shapes=[pltpu.VMEM((1, 1), jnp.float32)],
        compiler_params=pltpu.CompilerParams(
            dimension_semantics=("parallel", "arbitrary"),
            vmem_limit_bytes=_VMEM_LIMIT,
        ),
        cost_estimate=cost,
    )(g2, m2)
    return jnp.sum(partials)


# --------------------------------------------------------------------------
# Public entry point mirroring RRR_loss.forward.
# --------------------------------------------------------------------------
def rrr_loss(x, y, masks=None, grads=None, rrr_weight=1.0):
    """Pallas equivalent of RRR_loss.forward.  Returns a scalar f32."""
    loss1 = _cross_entropy(x, y)

    if grads is None or masks is None:
        # TODO(synk): the PyTorch module sets loss_2 = 0 (a python int) when
        # masks is None but grads is not, then calls loss_2.item(), which
        # raises; here both None cases return loss_1 (the loss_2 < 1e-16 branch).
        return loss1

    # TODO(synk): the PyTorch module prints 'Grads are NaN' when grads has NaNs;
    # a data-dependent host-side print has no Pallas equivalent and is omitted
    # (a NaN loss_2 still propagates to the combined loss, as in PyTorch).
    loss2 = _sum_prod(grads, masks)

    # Scalar combine (plain JAX).  Matches PyTorch's
    # `if loss_2.item() < 1e-16: return loss_1`: any loss_2 below 1e-16
    # (including negative) returns loss_1.
    w = jnp.asarray(rrr_weight, jnp.float32)
    tiny = loss2 < 1e-16
    loss2_safe = jnp.where(tiny, jnp.float32(1.0), loss2)
    scale = jnp.power(jnp.float32(10.0), jnp.ceil(jnp.log10(loss1 / loss2_safe)))
    return jnp.where(tiny, loss1, loss1 + w * scale * loss2)


# --------------------------------------------------------------------------
# Pure-JAX reference mirroring the PyTorch module (for verification).
# --------------------------------------------------------------------------
def _ref_rrr_loss(x, y, masks=None, grads=None, rrr_weight=1.0):
    logp = jax.nn.log_softmax(x.astype(jnp.float32), axis=-1)
    loss1 = -jnp.mean(jnp.take_along_axis(logp, y[:, None].astype(jnp.int32),
                                          axis=-1))
    if grads is None or masks is None:
        return loss1
    loss2 = jnp.sum(grads.astype(jnp.float32) * masks.astype(jnp.float32))
    tiny = loss2 < 1e-16
    scale = jnp.power(10.0, jnp.ceil(
        jnp.log10(loss1 / jnp.where(tiny, 1.0, loss2))))
    return jnp.where(tiny, loss1, loss1 + rrr_weight * scale * loss2)


if __name__ == "__main__":
    key = jax.random.PRNGKey(0)
    k1, k2, k3, k4, k5, k6 = jax.random.split(key, 6)

    N, C = 8, 32                        # batch of 8 logits over 32 classes
    img_shape = (2, 4, 16, 16)          # NCHW grads / masks; 2048 elems (lane aligned)

    x = jax.random.normal(k1, (N, C), dtype=jnp.float32)
    y = jax.random.randint(k2, (N,), 0, C, dtype=jnp.int32)
    grads = jax.random.uniform(k3, img_shape, dtype=jnp.float32) + 0.1   # > 0 => loss_2 > 1e-16
    masks = jax.random.uniform(k4, img_shape, dtype=jnp.float32)

    # Path 1: grads=None -> plain cross-entropy.
    ce_out = jax.block_until_ready(rrr_loss(x, y))
    ce_ref = _ref_rrr_loss(x, y)
    assert jnp.allclose(ce_out, ce_ref, rtol=1e-5, atol=1e-5), (ce_out, ce_ref)

    # Path 2: full RRR loss (lane-aligned grads/masks -> zero-copy (R, 128) path).
    full_out = jax.block_until_ready(
        rrr_loss(x, y, masks=masks, grads=grads, rrr_weight=1.0))
    full_ref = _ref_rrr_loss(x, y, masks=masks, grads=grads, rrr_weight=1.0)
    assert jnp.allclose(full_out, full_ref, rtol=1e-4, atol=1e-4), (full_out, full_ref)

    # Path 3: ragged element count (exercises the zero-copy (1, total) path).
    rag_shape = (2, 3, 9, 7)            # 378 elems, not a multiple of 128
    grads_r = jax.random.uniform(k5, rag_shape, dtype=jnp.float32) + 0.1
    masks_r = jax.random.uniform(k6, rag_shape, dtype=jnp.float32)
    rag_out = jax.block_until_ready(
        rrr_loss(x, y, masks=masks_r, grads=grads_r, rrr_weight=0.5))
    rag_ref = _ref_rrr_loss(x, y, masks=masks_r, grads=grads_r, rrr_weight=0.5)
    assert jnp.allclose(rag_out, rag_ref, rtol=1e-4, atol=1e-4), (rag_out, rag_ref)

    # Path 4: loss_2 < 1e-16 branch (zero masks) -> returns loss_1.
    zero_masks = jnp.zeros(img_shape, jnp.float32)
    z_out = jax.block_until_ready(rrr_loss(x, y, masks=zero_masks, grads=grads))
    assert jnp.allclose(z_out, ce_ref, rtol=1e-5, atol=1e-5), (z_out, ce_ref)

    print("KERNEL_OK")
</pallas_src>

<mosaic_0001>
module attributes {stable_mosaic.version = 11 : i64} {
  func.func @_ce_kernel(%arg0: i32, %arg1: memref<8x32xf32, #tpu.memory_space<vmem>>, %arg2: memref<8x1xi32, #tpu.memory_space<vmem>>, %arg3: memref<1x1xf32, #tpu.memory_space<vmem>>, %arg4: memref<1x1xf32, #tpu.memory_space<vmem>>) attributes {dimension_semantics = [#tpu.dimension_semantics<arbitrary>], iteration_bounds = array<i64: 1>, scalar_prefetch = 0 : i64, scratch_operands = 1 : i64, tpu.core_type = #tpu.core_type<tc>, window_params = [{transform_indices = @transform_0, window_bounds = array<i64: 8, 32>}, {transform_indices = @transform_1, window_bounds = array<i64: 8, 1>}, {pipeline_mode = #tpu.pipeline_mode<synchronous>, transform_indices = @transform_2, window_bounds = array<i64: 1, 1>}]} {
    %c0_i32 = arith.constant 0 : i32
    %0 = arith.cmpi eq, %arg0, %c0_i32 : i32
    %1 = arith.extui %0 : i1 to i32
    %c0_i32_0 = arith.constant 0 : i32
    %2 = arith.cmpi ne, %1, %c0_i32_0 : i32
    scf.if %2 {
      %cst_16 = arith.constant 0.000000e+00 : f32
      %38 = vector.broadcast %cst_16 : f32 to vector<1x1xf32>
      %c0_17 = arith.constant 0 : index
      %c0_18 = arith.constant 0 : index
      %39 = vector.load %arg4[%c0_17, %c0_18] : memref<1x1xf32, #tpu.memory_space<vmem>>, vector<1x1xf32>
      tpu.vector_store %arg4[%c0_17, %c0_18], %38 {strides = array<i32>} : memref<1x1xf32, #tpu.memory_space<vmem>>, vector<1x1xf32>,
    } else {
    }
    %c0 = arith.constant 0 : index
    %c0_1 = arith.constant 0 : index
    %3 = vector.load %arg1[%c0, %c0_1] : memref<8x32xf32, #tpu.memory_space<vmem>>, vector<8x32xf32>
    %c0_2 = arith.constant 0 : index
    %c0_3 = arith.constant 0 : index
    %4 = vector.load %arg4[%c0_2, %c0_3] : memref<1x1xf32, #tpu.memory_space<vmem>>, vector<1x1xf32>
    %c0_4 = arith.constant 0 : index
    %c0_5 = arith.constant 0 : index
    %5 = vector.load %arg2[%c0_4, %c0_5] : memref<8x1xi32, #tpu.memory_space<vmem>>, vector<8x1xi32>
    %c8_i32 = arith.constant 8 : i32
    %6 = arith.muli %arg0, %c8_i32 : i32
    %7 = tpu.iota {dimensions = array<i32: 0>} : vector<8x1xi32>
    %8 = vector.broadcast %6 : i32 to vector<8x1xi32>
    %9 = arith.addi %7, %8 : vector<8x1xi32>
    %c8_i32_6 = arith.constant 8 : i32
    %10 = vector.broadcast %c8_i32_6 : i32 to vector<8x1xi32>
    %11 = arith.cmpi slt, %9, %10 : vector<8x1xi32>
    %12 = tpu.iota {dimensions = array<i32: 1>} : vector<8x32xi32>
    %cst = arith.constant dense<0xFF800000> : vector<8xf32>
    %13 = vector.multi_reduction <maximumf>, %3, %cst [1] : vector<8x32xf32> to vector<8xf32>
    %14 = vector.shape_cast %13 : vector<8xf32> to vector<8x1xf32>
    %15 = vector.broadcast %14 : vector<8x1xf32> to vector<8x32xf32>
    %16 = arith.subf %3, %15 : vector<8x32xf32>
    %17 = math.exp %16 : vector<8x32xf32>
    %cst_7 = arith.constant dense<0.000000e+00> : vector<8xf32>
    %18 = vector.multi_reduction <add>, %17, %cst_7 [1] : vector<8x32xf32> to vector<8xf32>
    %19 = vector.shape_cast %18 : vector<8xf32> to vector<8x1xf32>
    %20 = math.log %19 : vector<8x1xf32>
    %21 = arith.addf %20, %14 : vector<8x1xf32>
    %22 = vector.broadcast %5 : vector<8x1xi32> to vector<8x32xi32>
    %23 = arith.cmpi eq, %12, %22 : vector<8x32xi32>
    %cst_8 = arith.constant 0.000000e+00 : f32
    %24 = vector.broadcast %cst_8 : f32 to vector<8x32xf32>
    %25 = arith.select %23, %3, %24 : vector<8x32xi1>, vector<8x32xf32>
    %cst_9 = arith.constant dense<0.000000e+00> : vector<8xf32>
    %26 = vector.multi_reduction <add>, %25, %cst_9 [1] : vector<8x32xf32> to vector<8xf32>
    %27 = vector.shape_cast %26 : vector<8xf32> to vector<8x1xf32>
    %28 = arith.subf %21, %27 : vector<8x1xf32>
    %cst_10 = arith.constant 0.000000e+00 : f32
    %29 = vector.broadcast %cst_10 : f32 to vector<8x1xf32>
    %30 = arith.select %11, %28, %29 : vector<8x1xi1>, vector<8x1xf32>
    %cst_11 = arith.constant dense<0.000000e+00> : vector<1xf32>
    %31 = vector.multi_reduction <add>, %30, %cst_11 [0] : vector<8x1xf32> to vector<1xf32>
    %32 = vector.shape_cast %31 : vector<1xf32> to vector<1x1xf32>
    %33 = arith.addf %4, %32 : vector<1x1xf32>
    %c0_12 = arith.constant 0 : index
    %c0_13 = arith.constant 0 : index
    %34 = vector.load %arg4[%c0_12, %c0_13] : memref<1x1xf32, #tpu.memory_space<vmem>>, vector<1x1xf32>
    tpu.vector_store %arg4[%c0_12, %c0_13], %33 {strides = array<i32>} : memref<1x1xf32, #tpu.memory_space<vmem>>, vector<1x1xf32>,
    %c0_i32_14 = arith.constant 0 : i32
    %35 = arith.cmpi eq, %arg0, %c0_i32_14 : i32
    %36 = arith.extui %35 : i1 to i32
    %c0_i32_15 = arith.constant 0 : i32
    %37 = arith.cmpi ne, %36, %c0_i32_15 : i32
    scf.if %37 {
      %c0_16 = arith.constant 0 : index
      %c0_17 = arith.constant 0 : index
      %38 = vector.load %arg4[%c0_16, %c0_17] : memref<1x1xf32, #tpu.memory_space<vmem>>, vector<1x1xf32>
      %cst_18 = arith.constant 1.250000e-01 : f32
      %39 = vector.broadcast %cst_18 : f32 to vector<1x1xf32>
      %40 = arith.mulf %38, %39 : vector<1x1xf32>
      %c0_19 = arith.constant 0 : index
      %c0_20 = arith.constant 0 : index
      %41 = vector.load %arg3[%c0_19, %c0_20] : memref<1x1xf32, #tpu.memory_space<vmem>>, vector<1x1xf32>
      tpu.vector_store %arg3[%c0_19, %c0_20], %40 {strides = array<i32>} : memref<1x1xf32, #tpu.memory_space<vmem>>, vector<1x1xf32>,
    } else {
    }
    return
  }
  func.func @transform_0(%arg0: i32) -> (i32, i32) {
    %c0_i32 = arith.constant 0 : i32
    %c0_i32_0 = arith.constant 0 : i32
    return %arg0, %c0_i32 : i32, i32
  }
  func.func @transform_1(%arg0: i32) -> (i32, i32) {
    %c0_i32 = arith.constant 0 : i32
    %c0_i32_0 = arith.constant 0 : i32
    return %arg0, %c0_i32 : i32, i32
  }
  func.func @transform_2(%arg0: i32) -> (i32, i32) {
    %c0_i32 = arith.constant 0 : i32
    %c0_i32_0 = arith.constant 0 : i32
    %c0_i32_1 = arith.constant 0 : i32
    return %c0_i32, %c0_i32_0 : i32, i32
  }
}

</mosaic_0001>

<llo_original>
// kernel: tpu_custom_call.1
$region0: #{tpu_custom_call.1}
  #allocation0 [shape = 'u32[]', space=smem, size = 0x4, offset = 0x4, fixed_abs, tag = 'smem constant byte address 0x4 - core index']
  #allocation1 [shape = 'u32[72,128]{1,0:T(1,128)}', space=vmem, size = 0x9000, scoped, tag = 'internal scratch']
  #allocation2 [shape = 'f32[1,1]{1,0:T(1,128)}', space=vmem, size = 0x200, scoped, tag = 'scratch operand']
  %s0 = inlined_call_operand.vmem [shape: f32[8,32], index: 0, kind: input, shape index: {}]
  %s1 = inlined_call_operand.vmem [shape: s32[8,1], index: 1, kind: input, shape index: {}]
  %s2 = inlined_call_operand.hbm [shape: f32[1,1], index: 2, kind: output, shape index: {}]
  %s3 = sld [smem:[#allocation0]]
  $region26: #{tpu_custom_call.1} parent=0
    _
  %s5 = ssub.s32 1, %s3
  %s6 = scalar_select 0, %s5, %s3
  $region1: #{tpu_custom_call.1} parent=0
    #allocation3 [shape = 'u8[512]{0}', space=vmem, size = 0x400, scoped, tag = 'output window, operand 0, single buffered']
    #allocation4 [shape = 's32[1]{0}', space=sflag, size = 0x4, scoped, tag = 'scoped memory for tpu_custom_call.1']
    %7 = vsyncpa [#allocation4], 0
    // Predicated region
    $region2: #{tpu_custom_call.1} parent=1 // pred_check
      _
    $region3: #{tpu_custom_call.1} parent=1 // pred_check_branch
      %9 = sbr.rel (0) target = $region5
    $region4: #{tpu_custom_call.1} parent=1 // pred_region
      _
    $region5: #{tpu_custom_call.1} parent=1 // pred_fallthru
      _
    // Predicated region
    $region6: #{tpu_custom_call.1} parent=1 // pred_check
      _
    $region7: #{tpu_custom_call.1} parent=1 // pred_check_branch
      %11 = sbr.rel (0) target = $region9
    $region8: #{tpu_custom_call.1} parent=1 // pred_region
      _
    $region9: #{tpu_custom_call.1} parent=1 // pred_fallthru
      _
    %p12 = scmp.eq.s32.totalorder 0, 0
    // Predicated region
    $region10: #{tpu_custom_call.1} parent=1 // pred_check
      %p13 = pneg %p12
    $region11: #{tpu_custom_call.1} parent=1 // pred_check_branch
      %15 = sbr.rel (%p13) target = $region13
    $region12: #{tpu_custom_call.1} parent=1 // pred_region
      %vm16 = vcmask 0
      %17 = vst.msk [vmem:[#allocation2] sm:$0x1] %vm16, 0.0
    $region13: #{tpu_custom_call.1} parent=1 // pred_fallthru
      _
    %v18 = vld [vmem:[%s0] sm:$0xff]
    %v19 = vld [vmem:[#allocation2] sm:$0x1]
    %v20 = vld [vmem:[%s1] sm:$0xff]
    %s21 = smul.u32 0, 8
    %v22 = vlaneseq
    %v23 = vshrl.u32 %v22, 7
    %v24 = vstv %s21
    %v25 = vadd.s32 %v23, %v24
    %vm26 = vcmp.lt.s32.totalorder %v25, 8
    %v27 = vlaneseq
    %v28 = vand.u32 %v27, 127
    %vm29 = vcmask 261120
    %v30 = vsel %vm29, %v18, -inf
    %31 = vmax.xlane.f32.xlu0 %v30
    %v32 = vpop.xlane.xlu0 %31
    %v33 = vsub.f32 %v18, %v32
    %v34 = vmul.f32 %v33, 1.442695
    %v35 = vpow.pop %v34
    %v36 = vsel %vm29, %v35, 0.0
    %37 = vadd.xlane.f32.xlu0 %v36
    %v38 = vpop.xlane.xlu0 %37
    %v39 = vlog2.pop %v38
    %v40 = vmul.f32 %v39, 0.6931472
    %v41 = vadd.f32 %v40, %v32
    %42 = vset.pattern.permute.xlu0 0
    %43 = vperm.xlu0 %42, %v20
    %v44 = vpop.permute.xlu0 %43
    %vm45 = vcmp.eq.s32.totalorder %v28, %v44
    %v46 = vsel %vm45, %v18, 0.0
    %v47 = vsel %vm29, %v46, 0.0
    %48 = vadd.xlane.f32.xlu0 %v47
    %v49 = vpop.xlane.xlu0 %48
    %v50 = vsub.f32 %v41, %v49
    %v51 = vsel %vm26, %v50, 0.0
    %v52 = vrot.slane %v51, 4
    %v53 = vadd.f32 %v51, %v52
    %v54 = vrot.slane %v53, 2
    %v55 = vadd.f32 %v53, %v54
    %v56 = vrot.slane %v55, 1
    %v57 = vadd.f32 %v55, %v56
    %v58 = vadd.f32 %v19, %v57
    %vm59 = vcmask 0
    %60 = vst.msk [vmem:[#allocation2] sm:$0x1] %vm59, %v58
    // Predicated region
    $region14: #{tpu_custom_call.1} parent=1 // pred_check
      %p61 = pneg %p12
    $region15: #{tpu_custom_call.1} parent=1 // pred_check_branch
      %63 = sbr.rel (%p61) target = $region17
    $region16: #{tpu_custom_call.1} parent=1 // pred_region
      %v64 = vld [vmem:[#allocation2] sm:$0x1]
      %v65 = vmul.f32 %v64, 0.125
      %66 = vst.msk [vmem:[#allocation3] sm:$0x1] %vm59, %v65
    $region17: #{tpu_custom_call.1} parent=1 // pred_fallthru
      _
    // Predicated region
    $region18: #{tpu_custom_call.1} parent=1 // pred_check
      _
    $region19: #{tpu_custom_call.1} parent=1 // pred_check_branch
      %68 = sbr.rel (0) target = $region21
    $region20: #{tpu_custom_call.1} parent=1 // pred_region
      %70 = vsyncadd [#allocation4], 0
      %s72 = sshll.u32 [#allocation3], 4
      %s73 = int_to_ptr.vmem [resolvable:$true] %s72
      %s74 = sshll.u32 %s2, 4
      %s75 = int_to_ptr.hbm [resolvable:$true] %s74
      %77 = dma.vmem_to_hbm [thread:$0]  %s73, 16, %s75, [#allocation4]
    $region21: #{tpu_custom_call.1} parent=1 // pred_fallthru
      _
    // Predicated region
    $region22: #{tpu_custom_call.1} parent=1 // pred_check
      _
    $region23: #{tpu_custom_call.1} parent=1 // pred_check_branch
      %79 = sbr.rel (0) target = $region25
    $region24: #{tpu_custom_call.1} parent=1 // pred_region
      %81 = dma.done [#allocation4], 16
    $region25: #{tpu_custom_call.1} parent=1 // pred_fallthru
      _
    %82 = vsyncpa [#allocation4], 1

</llo_original>
